<compile_context>
chip_gen: v5e
topology: v5e:2x2
jax: 0.10.0
libtpu: 0.0.40
codegen_flags: <defaults>
</compile_context>

<pallas_src>
import functools

import jax
import jax.numpy as jnp
from jax.experimental import pallas as pl
from jax.experimental.pallas import tpu as pltpu


def _cfg_kernel(B,
                scale_ref,   # SMEM (B,)       f32   y['scale']
                t_ref,       # SMEM (B,)       f32   timesteps
                x_ref,       # VMEM (B, C, S)  f32
                w_ref,       # VMEM (C, C)     f32   1x1-conv weight
                freqs_ref,   # VMEM (C, 1)     f32   timestep-embedding frequencies
                bias_ref,    # VMEM (C, 1)     f32
                cond_ref,    # VMEM (C, 1)     f32   conditional embedding
                out_ref):    # VMEM (B, C, S)  f32
    w = w_ref[...]
    freqs = freqs_ref[...]
    bias = bias_ref[...]
    cond = cond_ref[...]
    # B is a small static Python int -> trace-time unroll; all slices are static.
    for b in range(B):
        hb = jnp.dot(w, x_ref[b], preferred_element_type=jnp.float32)   # (C, S)  MXU
        t_emb = jnp.sin(t_ref[b] * freqs)                                # (C, 1)  EUP
        add_u = bias + t_emb                                             # bias + t_emb
        add_c = add_u + cond                                             # + cond_emb
        out_uncond = jnp.tanh(hb + add_u)    # unconditional pass (y['uncond']=True)
        out_cond = jnp.tanh(hb + add_c)      # conditional pass
        out_ref[b] = out_uncond + scale_ref[b] * (out_cond - out_uncond)


def _cfg_kernel_eval(B,
                     t_ref,      # SMEM (B,)
                     x_ref,      # VMEM (B, C, S)
                     w_ref,      # VMEM (C, C)
                     freqs_ref,  # VMEM (C, 1)
                     bias_ref,   # VMEM (C, 1)
                     out_ref):   # VMEM (B, C, S)
    # eval_metric=True path: only the unconditional pass; cond_emb / scale never enter.
    w = w_ref[...]
    freqs = freqs_ref[...]
    bias = bias_ref[...]
    for b in range(B):
        hb = jnp.dot(w, x_ref[b], preferred_element_type=jnp.float32)   # (C, S)
        add_u = bias + jnp.sin(t_ref[b] * freqs)
        out_ref[b] = jnp.tanh(hb + add_u)


def _vmem():
    return pl.BlockSpec(memory_space=pltpu.MemorySpace.VMEM)


def _smem():
    return pl.BlockSpec(memory_space=pltpu.MemorySpace.SMEM)


def classifier_free_sample(params, x, timesteps, y=None, eval_metric=False):
    """JAX/Pallas equivalent of ClassifierFreeSampleModel.forward."""
    B, C, H, W = x.shape
    S = H * W

    # Free row-major bitcast: (B, C, H, W) -> (B, C, S).  No transpose, no HBM rewrite.
    xs = x.astype(jnp.float32).reshape(B, C, S)
    w = params["W"].astype(jnp.float32)
    freqs = params["freqs"].astype(jnp.float32).reshape(C, 1)
    bias = params["bias"].astype(jnp.float32).reshape(C, 1)
    ts = timesteps.astype(jnp.float32)

    io_bytes = 2 * xs.size * 4  # x in + out out dominate; params are negligible
    if eval_metric:
        cost = pl.CostEstimate(
            flops=2 * B * C * C * S + 2 * B * C * S,
            transcendentals=B * C * S + B * C,
            bytes_accessed=io_bytes)
        out = pl.pallas_call(
            functools.partial(_cfg_kernel_eval, B),
            out_shape=jax.ShapeDtypeStruct((B, C, S), jnp.float32),
            in_specs=[_smem(),   # timesteps (B,)
                      _vmem(),   # x (B, C, S)
                      _vmem(),   # W (C, C)
                      _vmem(),   # freqs (C, 1)
                      _vmem()],  # bias (C, 1)
            out_specs=_vmem(),
            cost_estimate=cost,
        )(ts, xs, w, freqs, bias)
    else:
        cond = params["cond_emb"].astype(jnp.float32).reshape(C, 1)
        scale = y["scale"].astype(jnp.float32)
        cost = pl.CostEstimate(
            flops=2 * B * C * C * S + 8 * B * C * S,
            transcendentals=2 * B * C * S + B * C,
            bytes_accessed=io_bytes)
        out = pl.pallas_call(
            functools.partial(_cfg_kernel, B),
            out_shape=jax.ShapeDtypeStruct((B, C, S), jnp.float32),
            in_specs=[_smem(),   # scale (B,)
                      _smem(),   # timesteps (B,)
                      _vmem(),   # x (B, C, S)
                      _vmem(),   # W (C, C)
                      _vmem(),   # freqs (C, 1)
                      _vmem(),   # bias (C, 1)
                      _vmem()],  # cond_emb (C, 1)
            out_specs=_vmem(),
            cost_estimate=cost,
        )(scale, ts, xs, w, freqs, bias, cond)

    return out.reshape(B, C, H, W)


def classifier_free_sample_reference(params, x, timesteps, y=None, eval_metric=False):
    """Pure-JAX reference mirroring the PyTorch wrapper semantics."""
    B, C, H, W = x.shape
    xs = x.reshape(B, C, H * W).astype(jnp.float32)
    t_emb = jnp.sin(timesteps.astype(jnp.float32)[:, None] * params["freqs"][None, :])
    h = (jnp.einsum("oc,bcs->bos", params["W"], xs)
         + params["bias"][None, :, None]
         + t_emb[:, :, None])
    out = jnp.tanh(h + params["cond_emb"][None, :, None])        # conditional pass
    out_uncond = jnp.tanh(h)                                     # unconditional pass
    if eval_metric:
        res = out_uncond
    else:
        res = out_uncond + y["scale"].reshape(-1, 1, 1) * (out - out_uncond)
    return res.reshape(B, C, H, W)


if __name__ == "__main__":
    B, C, H, W = 2, 8, 16, 16   # S = 256: lane-dense last dim; C = 8: f32 sublane aligned

    key = jax.random.PRNGKey(0)
    k_x, k_w, k_b, k_c, k_s, k_t = jax.random.split(key, 6)

    params = {
        "W": jax.random.normal(k_w, (C, C), jnp.float32) * 0.3,
        "bias": jax.random.normal(k_b, (C,), jnp.float32) * 0.1,
        "cond_emb": jax.random.normal(k_c, (C,), jnp.float32) * 0.5,
        "freqs": jnp.exp(-jnp.arange(C, dtype=jnp.float32) / C),
    }

    x = jax.random.normal(k_x, (B, C, H, W), jnp.float32)
    timesteps = jax.random.uniform(k_t, (B,), jnp.float32, 0.0, 100.0)
    y = {
        "scale": jax.random.uniform(k_s, (B,), jnp.float32, 1.0, 4.0),
        # 'uncond_audio' / 'uncond' flags are handled structurally inside the kernel.
    }

    out = classifier_free_sample(params, x, timesteps, y, eval_metric=False)
    out = jax.block_until_ready(out)

    ref = classifier_free_sample_reference(params, x, timesteps, y, eval_metric=False)
    assert out.shape == (B, C, H, W)
    assert jnp.allclose(out, ref, atol=1e-5, rtol=1e-5), "mismatch vs reference"

    # Also exercise the eval_metric=True branch (returns out_uncond only).
    out_eval = jax.block_until_ready(
        classifier_free_sample(params, x, timesteps, y, eval_metric=True))
    ref_eval = classifier_free_sample_reference(params, x, timesteps, y, eval_metric=True)
    assert jnp.allclose(out_eval, ref_eval, atol=1e-5, rtol=1e-5)

    print("KERNEL_OK")
</pallas_src>

<mosaic_0001>
module attributes {stable_mosaic.version = 11 : i64} {
  func.func @_cfg_kernel(%arg0: memref<2xf32, #tpu.memory_space<smem>>, %arg1: memref<2xf32, #tpu.memory_space<smem>>, %arg2: memref<2x8x256xf32, #tpu.memory_space<vmem>>, %arg3: memref<8x8xf32, #tpu.memory_space<vmem>>, %arg4: memref<8x1xf32, #tpu.memory_space<vmem>>, %arg5: memref<8x1xf32, #tpu.memory_space<vmem>>, %arg6: memref<8x1xf32, #tpu.memory_space<vmem>>, %arg7: memref<2x8x256xf32, #tpu.memory_space<vmem>>) attributes {dimension_semantics = [], scalar_prefetch = 0 : i64, scratch_operands = 0 : i64, tpu.core_type = #tpu.core_type<tc>} {
    %c0 = arith.constant 0 : index
    %c0_0 = arith.constant 0 : index
    %0 = vector.load %arg3[%c0, %c0_0] : memref<8x8xf32, #tpu.memory_space<vmem>>, vector<8x8xf32>
    %c0_1 = arith.constant 0 : index
    %c0_2 = arith.constant 0 : index
    %1 = vector.load %arg4[%c0_1, %c0_2] : memref<8x1xf32, #tpu.memory_space<vmem>>, vector<8x1xf32>
    %c0_3 = arith.constant 0 : index
    %c0_4 = arith.constant 0 : index
    %2 = vector.load %arg5[%c0_3, %c0_4] : memref<8x1xf32, #tpu.memory_space<vmem>>, vector<8x1xf32>
    %c0_5 = arith.constant 0 : index
    %c0_6 = arith.constant 0 : index
    %3 = vector.load %arg6[%c0_5, %c0_6] : memref<8x1xf32, #tpu.memory_space<vmem>>, vector<8x1xf32>
    %c0_7 = arith.constant 0 : index
    %c0_8 = arith.constant 0 : index
    %c0_9 = arith.constant 0 : index
    %4 = vector.load %arg2[%c0_7, %c0_8, %c0_9] : memref<2x8x256xf32, #tpu.memory_space<vmem>>, vector<1x8x256xf32>
    %5 = vector.shape_cast %4 : vector<1x8x256xf32> to vector<8x256xf32>
    %cst = arith.constant dense<0.000000e+00> : vector<8x256xf32>
    %6 = tpu.matmul %0, %5, %cst {dimension_numbers = #tpu.dot_dimension_numbers<[1], [0], [0], [1], [0, 0, 1, 1], [], []>} : vector<8x8xf32>, vector<8x256xf32>, vector<8x256xf32> -> vector<8x256xf32>
    %c0_10 = arith.constant 0 : index
    %7 = memref.load %arg1[%c0_10] : memref<2xf32, #tpu.memory_space<smem>>
    %8 = vector.broadcast %7 : f32 to vector<8x1xf32>
    %9 = arith.mulf %8, %1 : vector<8x1xf32>
    %10 = math.sin %9 : vector<8x1xf32>
    %11 = arith.addf %2, %10 : vector<8x1xf32>
    %12 = arith.addf %11, %3 : vector<8x1xf32>
    %13 = vector.broadcast %11 : vector<8x1xf32> to vector<8x256xf32>
    %14 = arith.addf %6, %13 : vector<8x256xf32>
    %15 = math.tanh %14 : vector<8x256xf32>
    %16 = vector.broadcast %12 : vector<8x1xf32> to vector<8x256xf32>
    %17 = arith.addf %6, %16 : vector<8x256xf32>
    %18 = math.tanh %17 : vector<8x256xf32>
    %c0_11 = arith.constant 0 : index
    %19 = memref.load %arg0[%c0_11] : memref<2xf32, #tpu.memory_space<smem>>
    %20 = arith.subf %18, %15 : vector<8x256xf32>
    %21 = vector.broadcast %19 : f32 to vector<8x256xf32>
    %22 = arith.mulf %21, %20 : vector<8x256xf32>
    %23 = arith.addf %15, %22 : vector<8x256xf32>
    %c0_12 = arith.constant 0 : index
    %c0_13 = arith.constant 0 : index
    %c0_14 = arith.constant 0 : index
    %24 = vector.load %arg7[%c0_12, %c0_13, %c0_14] : memref<2x8x256xf32, #tpu.memory_space<vmem>>, vector<1x8x256xf32>
    %25 = vector.shape_cast %24 : vector<1x8x256xf32> to vector<8x256xf32>
    %26 = vector.shape_cast %23 : vector<8x256xf32> to vector<1x8x256xf32>
    tpu.vector_store %arg7[%c0_12, %c0_13, %c0_14], %26 {strides = array<i32>} : memref<2x8x256xf32, #tpu.memory_space<vmem>>, vector<1x8x256xf32>,
    %c1 = arith.constant 1 : index
    %c0_15 = arith.constant 0 : index
    %c0_16 = arith.constant 0 : index
    %27 = vector.load %arg2[%c1, %c0_15, %c0_16] : memref<2x8x256xf32, #tpu.memory_space<vmem>>, vector<1x8x256xf32>
    %28 = vector.shape_cast %27 : vector<1x8x256xf32> to vector<8x256xf32>
    %cst_17 = arith.constant dense<0.000000e+00> : vector<8x256xf32>
    %29 = tpu.matmul %0, %28, %cst_17 {dimension_numbers = #tpu.dot_dimension_numbers<[1], [0], [0], [1], [0, 0, 1, 1], [], []>} : vector<8x8xf32>, vector<8x256xf32>, vector<8x256xf32> -> vector<8x256xf32>
    %c1_18 = arith.constant 1 : index
    %30 = memref.load %arg1[%c1_18] : memref<2xf32, #tpu.memory_space<smem>>
    %31 = vector.broadcast %30 : f32 to vector<8x1xf32>
    %32 = arith.mulf %31, %1 : vector<8x1xf32>
    %33 = math.sin %32 : vector<8x1xf32>
    %34 = arith.addf %2, %33 : vector<8x1xf32>
    %35 = arith.addf %34, %3 : vector<8x1xf32>
    %36 = vector.broadcast %34 : vector<8x1xf32> to vector<8x256xf32>
    %37 = arith.addf %29, %36 : vector<8x256xf32>
    %38 = math.tanh %37 : vector<8x256xf32>
    %39 = vector.broadcast %35 : vector<8x1xf32> to vector<8x256xf32>
    %40 = arith.addf %29, %39 : vector<8x256xf32>
    %41 = math.tanh %40 : vector<8x256xf32>
    %c1_19 = arith.constant 1 : index
    %42 = memref.load %arg0[%c1_19] : memref<2xf32, #tpu.memory_space<smem>>
    %43 = arith.subf %41, %38 : vector<8x256xf32>
    %44 = vector.broadcast %42 : f32 to vector<8x256xf32>
    %45 = arith.mulf %44, %43 : vector<8x256xf32>
    %46 = arith.addf %38, %45 : vector<8x256xf32>
    %c1_20 = arith.constant 1 : index
    %c0_21 = arith.constant 0 : index
    %c0_22 = arith.constant 0 : index
    %47 = vector.load %arg7[%c1_20, %c0_21, %c0_22] : memref<2x8x256xf32, #tpu.memory_space<vmem>>, vector<1x8x256xf32>
    %48 = vector.shape_cast %47 : vector<1x8x256xf32> to vector<8x256xf32>
    %49 = vector.shape_cast %46 : vector<8x256xf32> to vector<1x8x256xf32>
    tpu.vector_store %arg7[%c1_20, %c0_21, %c0_22], %49 {strides = array<i32>} : memref<2x8x256xf32, #tpu.memory_space<vmem>>, vector<1x8x256xf32>,
    return
  }
}

</mosaic_0001>

<llo_original>
// kernel: tpu_custom_call.1
$region0: #{tpu_custom_call.1}
  #allocation0 [shape = 'u32[]', space=smem, size = 0x4, offset = 0x4, fixed_abs, tag = 'smem constant byte address 0x4 - core index']
  #allocation1 [shape = 'u32[72,128]{1,0:T(1,128)}', space=vmem, size = 0x9000, scoped, tag = 'internal scratch']
  %s0 = inlined_call_operand.vmem [shape: f32[2], index: 0, kind: input, shape index: {}]
  %s1 = inlined_call_operand.vmem [shape: f32[2], index: 1, kind: input, shape index: {}]
  %s2 = inlined_call_operand.hbm [shape: f32[2,8,256], index: 2, kind: input, shape index: {}]
  %s3 = inlined_call_operand.vmem [shape: f32[8,8], index: 3, kind: input, shape index: {}]
  %s4 = inlined_call_operand.vmem [shape: f32[8,1], index: 4, kind: input, shape index: {}]
  %s5 = inlined_call_operand.vmem [shape: f32[8,1], index: 5, kind: input, shape index: {}]
  %s6 = inlined_call_operand.vmem [shape: f32[8,1], index: 6, kind: input, shape index: {}]
  %s7 = inlined_call_operand.hbm [shape: f32[2,8,256], index: 7, kind: output, shape index: {}]
  %s8 = sld [smem:[#allocation0]]
  $region50: #{tpu_custom_call.1} parent=0
    _
  %s10 = ssub.s32 1, %s8
  %s11 = scalar_select 0, %s10, %s8
  $region1: #{tpu_custom_call.1} parent=0
    #allocation2 [shape = 'u8[512]{0}', space=smem, size = 0x200, scoped, tag = 'input window, operand 0, single buffered']
    #allocation3 [shape = 's32[1]{0}', space=sflag, size = 0x4, scoped, tag = 'scoped memory for tpu_custom_call.1']
    #allocation4 [shape = 's32[1]{0}', space=sflag, size = 0x4, scoped, tag = 'scoped memory for tpu_custom_call.1']
    #allocation5 [shape = 's32[1]{0}', space=sflag, size = 0x4, scoped, tag = 'scoped memory for tpu_custom_call.1']
    #allocation6 [shape = 'u8[512]{0}', space=smem, size = 0x200, scoped, tag = 'input window, operand 1, single buffered']
    #allocation7 [shape = 's32[1]{0}', space=sflag, size = 0x4, scoped, tag = 'scoped memory for tpu_custom_call.1']
    #allocation8 [shape = 'u8[16384]{0}', space=vmem, size = 0x4000, scoped, tag = 'input window, operand 2, single buffered']
    #allocation9 [shape = 'u8[16384]{0}', space=vmem, size = 0x4000, scoped, tag = 'output window, operand 0, single buffered']
    %12 = vsyncpa [#allocation5], 0
    %13 = vsyncpa [#allocation7], 0
    %14 = vsyncpa [#allocation3], 0
    %15 = vsyncpa [#allocation4], 0
    // Predicated region
    $region2: #{tpu_custom_call.1} parent=1 // pred_check
      _
    $region3: #{tpu_custom_call.1} parent=1 // pred_check_branch
      %17 = sbr.rel (0) target = $region5
    $region4: #{tpu_custom_call.1} parent=1 // pred_region
      %19 = vsyncadd [#allocation5], 0
      %s21 = sshll.u32 %s0, 4
      %s22 = int_to_ptr.vmem [resolvable:$true] %s21
      %24 = dma.vmem_to_smem %s22, 16, [#allocation2], [#allocation5]
    $region5: #{tpu_custom_call.1} parent=1 // pred_fallthru
      _
    // Predicated region
    $region6: #{tpu_custom_call.1} parent=1 // pred_check
      _
    $region7: #{tpu_custom_call.1} parent=1 // pred_check_branch
      %26 = sbr.rel (0) target = $region9
    $region8: #{tpu_custom_call.1} parent=1 // pred_region
      %28 = vsyncadd [#allocation7], 0
      %s30 = sshll.u32 %s1, 4
      %s31 = int_to_ptr.vmem [resolvable:$true] %s30
      %33 = dma.vmem_to_smem %s31, 16, [#allocation6], [#allocation7]
    $region9: #{tpu_custom_call.1} parent=1 // pred_fallthru
      _
    // Predicated region
    $region10: #{tpu_custom_call.1} parent=1 // pred_check
      _
    $region11: #{tpu_custom_call.1} parent=1 // pred_check_branch
      %35 = sbr.rel (0) target = $region13
    $region12: #{tpu_custom_call.1} parent=1 // pred_region
      %37 = vsyncadd [#allocation3], 0
      %s38 = sshll.u32 %s2, 4
      %s39 = int_to_ptr.hbm [resolvable:$true] %s38
      %s40 = sshll.u32 [#allocation8], 4
      %s41 = int_to_ptr.vmem [resolvable:$true] %s40
      %46 = dma.hbm_to_vmem [thread:$0]  %s39, 512, %s41, [#allocation3], 256, 256, 16
    $region13: #{tpu_custom_call.1} parent=1 // pred_fallthru
      _
    // Predicated region
    $region14: #{tpu_custom_call.1} parent=1 // pred_check
      _
    $region15: #{tpu_custom_call.1} parent=1 // pred_check_branch
      %48 = sbr.rel (0) target = $region17
    $region16: #{tpu_custom_call.1} parent=1 // pred_region
      _
    $region17: #{tpu_custom_call.1} parent=1 // pred_fallthru
      _
    // Predicated region
    $region18: #{tpu_custom_call.1} parent=1 // pred_check
      _
    $region19: #{tpu_custom_call.1} parent=1 // pred_check_branch
      %50 = sbr.rel (0) target = $region21
    $region20: #{tpu_custom_call.1} parent=1 // pred_region
      _
    $region21: #{tpu_custom_call.1} parent=1 // pred_fallthru
      _
    // Predicated region
    $region22: #{tpu_custom_call.1} parent=1 // pred_check
      _
    $region23: #{tpu_custom_call.1} parent=1 // pred_check_branch
      %52 = sbr.rel (0) target = $region25
    $region24: #{tpu_custom_call.1} parent=1 // pred_region
      _
    $region25: #{tpu_custom_call.1} parent=1 // pred_fallthru
      _
    // Predicated region
    $region26: #{tpu_custom_call.1} parent=1 // pred_check
      _
    $region27: #{tpu_custom_call.1} parent=1 // pred_check_branch
      %54 = sbr.rel (0) target = $region29
    $region28: #{tpu_custom_call.1} parent=1 // pred_region
      _
    $region29: #{tpu_custom_call.1} parent=1 // pred_fallthru
      _
    // Predicated region
    $region30: #{tpu_custom_call.1} parent=1 // pred_check
      _
    $region31: #{tpu_custom_call.1} parent=1 // pred_check_branch
      %56 = sbr.rel (0) target = $region33
    $region32: #{tpu_custom_call.1} parent=1 // pred_region
      %58 = dma.done [#allocation5], 16
    $region33: #{tpu_custom_call.1} parent=1 // pred_fallthru
      _
    // Predicated region
    $region34: #{tpu_custom_call.1} parent=1 // pred_check
      _
    $region35: #{tpu_custom_call.1} parent=1 // pred_check_branch
      %60 = sbr.rel (0) target = $region37
    $region36: #{tpu_custom_call.1} parent=1 // pred_region
      %62 = dma.done [#allocation7], 16
    $region37: #{tpu_custom_call.1} parent=1 // pred_fallthru
      _
    // Predicated region
    $region38: #{tpu_custom_call.1} parent=1 // pred_check
      _
    $region39: #{tpu_custom_call.1} parent=1 // pred_check_branch
      %64 = sbr.rel (0) target = $region41
    $region40: #{tpu_custom_call.1} parent=1 // pred_region
      %66 = dma.done [#allocation3], 512
    $region41: #{tpu_custom_call.1} parent=1 // pred_fallthru
      _
    %67 = sfence
    %v68 = vld [vmem:[%s3] sm:$0xff]
    %v69 = vld [vmem:[%s4] sm:$0xff]
    %v70 = vld [vmem:[%s5] sm:$0xff]
    %v71 = vld [vmem:[%s6] sm:$0xff]
    %v72 = vld [vmem:[#allocation8] sm:$0xff]
    %v73 = vld [vmem:[#allocation8 + $0x8] sm:$0xff]
    %vm74 = vcmask 64512
    %v76 = vsel %vm74, %v68, 0
    %78 = vmatpush.msra.mxu0 0.0
    %79 = vmatpush.msra.mxu0 0.0
    %80 = vmatpush.msra.mxu0 0.0
    %81 = vmatpush.msra.mxu0 0.0
    %82 = vmatpush.msra.mxu0 0.0
    %83 = vmatpush.msra.mxu0 0.0
    %84 = vmatpush.msra.mxu0 0.0
    %85 = vmatpush.msra.mxu0 0.0
    %86 = vmatpush.msra.mxu0 0.0
    %87 = vmatpush.msra.mxu0 0.0
    %88 = vmatpush.msra.mxu0 0.0
    %89 = vmatpush.msra.mxu0 0.0
    %90 = vmatpush.msra.mxu0 0.0
    %91 = vmatpush.msra.mxu0 0.0
    %92 = vmatpush.msra.mxu0 0.0
    %93 = vmatpush.msra.mxu0 %v72
    %94 = vmatmul.f32.gmra.mxu0 %v76
    %v95 = vpop.f32.mrf.mxu0
    %v96 = vadd.f32 0.0, %v95
    %97 = vdwg.mxu0
    %98 = vmatpush.msra.mxu0 0.0
    %99 = vmatpush.msra.mxu0 0.0
    %100 = vmatpush.msra.mxu0 0.0
    %101 = vmatpush.msra.mxu0 0.0
    %102 = vmatpush.msra.mxu0 0.0
    %103 = vmatpush.msra.mxu0 0.0
    %104 = vmatpush.msra.mxu0 0.0
    %105 = vmatpush.msra.mxu0 0.0
    %106 = vmatpush.msra.mxu0 0.0
    %107 = vmatpush.msra.mxu0 0.0
    %108 = vmatpush.msra.mxu0 0.0
    %109 = vmatpush.msra.mxu0 0.0
    %110 = vmatpush.msra.mxu0 0.0
    %111 = vmatpush.msra.mxu0 0.0
    %112 = vmatpush.msra.mxu0 0.0
    %113 = vmatpush.msra.mxu0 %v73
    %114 = vmatmul.f32.gmra.mxu0 %v76
    %v115 = vpop.f32.mrf.mxu0
    %v116 = vadd.f32 0.0, %v115
    %117 = vdwg.mxu0
    %s118 = sld [smem:[#allocation6]]
    %v119 = vstv %s118
    %v120 = vmul.f32 %v119, %v69
    %v121 = vand.u32 2147483647, %v120
    %vm122 = vcmp.le.f32.partialorder %v121, 0.7853982
    %vm123 = vcmp.lt.s32.totalorder %v120, 0
    %v124 = vand.u32 %v120, 2139095040
    %v125 = vshrl.u32 %v124, 23
    %v126 = vsub.s32 %v125, 127
    %v127 = vand.u32 2147483647, %v120
    %v128 = vand.u32 %v127, 8388607
    %v129 = vor.u32 %v128, 8388608
    %v130 = vsub.s32 0, %v129
    %v131 = vadd.s32 %v126, 1
    %vm132 = vcmp.gt.s32.totalorder %v131, 0
    %v133 = vsel %vm132, %v131, 0
    %v134 = vshrl.u32 %v133, 5
    %v135 = vand.u32 %v133, 31
    %v136 = vsub.s32 32, %v135
    %v137 = vshrl.u32 683565275, %v136
    %v138 = vshll.u32 683565275, %v135
    %v139 = vshrl.u32 2475754826, %v136
    %v140 = vor.u32 %v138, %v139
    %v141 = vshll.u32 2475754826, %v135
    %v142 = vshrl.u32 2131351028, %v136
    %v143 = vor.u32 %v141, %v142
    %v144 = vshll.u32 2131351028, %v135
    %v145 = vshrl.u32 2102212464, %v136
    %v146 = vor.u32 %v144, %v145
    %v147 = vshll.u32 2102212464, %v135
    %v148 = vshrl.u32 920167782, %v136
    %v149 = vor.u32 %v147, %v148
    %v150 = vshll.u32 920167782, %v135
    %v151 = vshrl.u32 1326507024, %v136
    %v152 = vor.u32 %v150, %v151
    %vm153 = vcmp.lt.s32.totalorder %v134, 1
    %vm154 = vcmp.lt.s32.totalorder %v134, 2
    %vm155 = vcmp.lt.s32.totalorder %v134, 3
    %vm156 = vcmp.lt.s32.totalorder %v134, 4
    %v157 = vsel %vm153, %v137, %v140
    %v158 = vsel %vm156, %v146, 2102212464
    %v159 = vsel %vm155, %v143, %v158
    %v160 = vsel %vm154, %v157, %v159
    %v161 = vsel %vm153, %v140, %v143
    %v162 = vsel %vm156, %v149, 920167782
    %v163 = vsel %vm155, %v146, %v162
    %v164 = vsel %vm154, %v161, %v163
    %v165 = vsel %vm153, %v143, %v146
    %v166 = vsel %vm156, %v152, 1326507024
    %v167 = vsel %vm155, %v149, %v166
    %v168 = vsel %vm154, %v165, %v167
    %v169 = vshll.u32 %v129, 8
    %v170 = vand.u32 %v169, 65535
    %v171 = vshrl.u32 %v169, 16
    %v172 = vand.u32 %v168, 65535
    %v173 = vshrl.u32 %v168, 16
    %v174 = vmul.u32 %v170, %v172
    %v175 = vmul.u32 %v170, %v173
    %v176 = vmul.u32 %v171, %v172
    %v177 = vmul.u32 %v171, %v173
    %v178 = vshll.u32 %v175, 16
    %v179 = vshrl.u32 %v175, 16
    %v180 = vshll.u32 %v176, 16
    %v181 = vshrl.u32 %v176, 16
    %vm182 = vc.u32 %v174, %v178
    %v183 = vsel %vm182, 1, 0
    %v184 = vadd.s32 %v174, %v178
    %v185 = vadd.s32 %v177, %v183
    %vm186 = vc.u32 %v184, %v180
    %v187 = vsel %vm186, 1, 0
    %v188 = vadd.s32 %v184, %v180
    %v189 = vadd.s32 %v185, %v187
    %v190 = vadd.s32 %v189, %v179
    %v191 = vadd.s32 %v190, %v181
    %v192 = vand.u32 %v169, 65535
    %v193 = vshrl.u32 %v169, 16
    %v194 = vand.u32 %v164, 65535
    %v195 = vshrl.u32 %v164, 16
    %v196 = vmul.u32 %v192, %v194
    %v197 = vmul.u32 %v192, %v195
    %v198 = vmul.u32 %v193, %v194
    %v199 = vmul.u32 %v193, %v195
    %v200 = vshll.u32 %v197, 16
    %v201 = vshrl.u32 %v197, 16
    %v202 = vshll.u32 %v198, 16
    %v203 = vshrl.u32 %v198, 16
    %vm204 = vc.u32 %v196, %v200
    %v205 = vsel %vm204, 1, 0
    %v206 = vadd.s32 %v196, %v200
    %v207 = vadd.s32 %v199, %v205
    %vm208 = vc.u32 %v206, %v202
    %v209 = vsel %vm208, 1, 0
    %v210 = vadd.s32 %v206, %v202
    %v211 = vadd.s32 %v207, %v209
    %v212 = vadd.s32 %v211, %v201
    %v213 = vadd.s32 %v212, %v203
    %v214 = vmul.u32 %v169, %v160
    %v215 = vadd.s32 %v191, %v210
    %vm216 = vc.u32 %v191, %v210
    %v217 = vadd.s32 %v213, 1
    %v218 = vsel %vm216, %v217, %v213
    %v219 = vadd.s32 %v214, %v218
    %v220 = vadd.s32 %v219, 536870912
    %v221 = vshrl.u32 %v220, 30
    %v222 = vshll.u32 %v221, 30
    %v223 = vsub.s32 %v219, %v222
    %vm224 = vcmp.lt.s32.totalorder %v223, 0
    %v225 = vsub.s32 0, %v223
    %v226 = vsel %vm224, %v225, %v223
    %v227 = vclz %v226
    %v228 = vsub.s32 %v227, 2
    %vm229 = vcmp.gt.s32.totalorder 0, %v228
    %v230 = vsel %vm229, 0, %v228
    %v231 = vsub.s32 32, %v230
    %v232 = vshll.u32 %v223, %v230
    %v233 = vshrl.u32 %v215, %v231
    %v234 = vor.u32 %v232, %v233
    %v235 = vsub.s32 4294967266, %v230
    %v236 = vadd.s32 %v235, 127
    %v237 = vshll.u32 %v236, 23
    %v238 = vor.u32 4788187, %v237
    %v239 = vand.u32 2147483647, %v238
    %v241 = vcvt.s32.f32 %v234
    %v242 = vmul.f32 %v241, %v239
    %v243 = vxor.u32 %v242, 2147483648
    %v244 = vsel %vm123, %v243, %v242
    %v245 = vsub.s32 4, %v221
    %v246 = vsel %vm123, %v245, %v221
    %v247 = vsel %vm122, %v120, %v244
    %v248 = vsel %vm122, 0, %v246
    %v249 = vmul.f32 %v247, %v247
    %v250 = vmul.f32 %v249, -0.001358992
    %v251 = vadd.f32 %v250, 0.041655596
    %v252 = vmul.f32 %v249, %v251
    %v253 = vadd.f32 %v252, -0.4999988
    %v254 = vmul.f32 %v249, %v253
    %v255 = vadd.f32 1.0, %v254
    %v256 = vmul.f32 %v247, %v247
    %v257 = vmul.f32 %v256, -0.00019511016
    %v258 = vadd.f32 %v257, 0.008332121
    %v259 = vmul.f32 %v256, %v258
    %v260 = vadd.f32 %v259, -0.16666654
    %v261 = vmul.f32 %v256, %v260
    %v262 = vadd.f32 %v261, 1.0
    %v263 = vmul.f32 %v262, %v247
    %vm264 = vweird.f32 %v120
    %v265 = vadd.s32 %v248, 3
    %v266 = vand.u32 %v265, 3
    %vm267 = vcmp.lt.s32.totalorder %v266, 2
    %vm268 = vcmp.eq.s32.totalorder %v266, 0
    %v269 = vxor.u32 %v263, 2147483648
    %v270 = vsel %vm268, %v255, %v269
    %vm271 = vcmp.eq.s32.totalorder %v266, 2
    %v272 = vxor.u32 %v255, 2147483648
    %v273 = vsel %vm271, %v272, %v263
    %v274 = vsel %vm267, %v270, %v273
    %v275 = vsel %vm264, nan, %v274
    %v276 = vadd.f32 %v70, %v275
    %v277 = vadd.f32 %v276, %v71
    %279 = vset.pattern.permute.xlu0 0
    %280 = vperm.xlu0 %279, %v276
    %v281 = vpop.permute.xlu0 %280
    %v283 = vadd.f32 %v96, %v281
    %v284 = vadd.f32 %v116, %v281
    %v285 = vtanh.pop %v283
    %v286 = vtanh.pop %v284
    %288 = vset.pattern.permute.xlu0 0
    %289 = vperm.xlu0 %288, %v277
    %v290 = vpop.permute.xlu0 %289
    %v292 = vadd.f32 %v96, %v290
    %v293 = vadd.f32 %v116, %v290
    %v294 = vtanh.pop %v292
    %v295 = vtanh.pop %v293
    %s296 = sld [smem:[#allocation2]]
    %v297 = vsub.f32 %v294, %v285
    %v298 = vsub.f32 %v295, %v286
    %v299 = vstv %s296
    %v300 = vmul.f32 %v299, %v297
    %v301 = vmul.f32 %v299, %v298
    %v302 = vadd.f32 %v285, %v300
    %v303 = vadd.f32 %v286, %v301
    %304 = vst [vmem:[#allocation9] sm:$0xff] %v302
    %305 = vst [vmem:[#allocation9 + $0x8] sm:$0xff] %v303
    %s306 = scalar_lea.vmem [#allocation8], 16
    %v307 = vld [vmem:[%s306] sm:$0xff]
    %v308 = vld [vmem:[%s306 + $0x8] sm:$0xff]
    %309 = vmatpush.msra.mxu0 0.0
    %310 = vmatpush.msra.mxu0 0.0
    %311 = vmatpush.msra.mxu0 0.0
    %312 = vmatpush.msra.mxu0 0.0
    %313 = vmatpush.msra.mxu0 0.0
    %314 = vmatpush.msra.mxu0 0.0
    %315 = vmatpush.msra.mxu0 0.0
    %316 = vmatpush.msra.mxu0 0.0
    %317 = vmatpush.msra.mxu0 0.0
    %318 = vmatpush.msra.mxu0 0.0
    %319 = vmatpush.msra.mxu0 0.0
    %320 = vmatpush.msra.mxu0 0.0
    %321 = vmatpush.msra.mxu0 0.0
    %322 = vmatpush.msra.mxu0 0.0
    %323 = vmatpush.msra.mxu0 0.0
    %324 = vmatpush.msra.mxu0 %v307
    %325 = vmatmul.f32.gmra.mxu0 %v76
    %v326 = vpop.f32.mrf.mxu0
    %v327 = vadd.f32 0.0, %v326
    %328 = vdwg.mxu0
    %329 = vmatpush.msra.mxu0 0.0
    %330 = vmatpush.msra.mxu0 0.0
    %331 = vmatpush.msra.mxu0 0.0
    %332 = vmatpush.msra.mxu0 0.0
    %333 = vmatpush.msra.mxu0 0.0
    %334 = vmatpush.msra.mxu0 0.0
    %335 = vmatpush.msra.mxu0 0.0
    %336 = vmatpush.msra.mxu0 0.0
    %337 = vmatpush.msra.mxu0 0.0
    %338 = vmatpush.msra.mxu0 0.0
    %339 = vmatpush.msra.mxu0 0.0
    %340 = vmatpush.msra.mxu0 0.0
    %341 = vmatpush.msra.mxu0 0.0
    %342 = vmatpush.msra.mxu0 0.0
    %343 = vmatpush.msra.mxu0 0.0
    %344 = vmatpush.msra.mxu0 %v308
    %345 = vmatmul.f32.gmra.mxu0 %v76
    %v346 = vpop.f32.mrf.mxu0
    %v347 = vadd.f32 0.0, %v346
    %348 = vdwg.mxu0
    %s349 = sld [smem:[#allocation6 + $0x1]]
    %v350 = vstv %s349
    %v351 = vmul.f32 %v350, %v69
    %v352 = vand.u32 2147483647, %v351
    %vm353 = vcmp.le.f32.partialorder %v352, 0.7853982
    %vm354 = vcmp.lt.s32.totalorder %v351, 0
    %v355 = vand.u32 %v351, 2139095040
    %v356 = vshrl.u32 %v355, 23
    %v357 = vsub.s32 %v356, 127
    %v358 = vand.u32 2147483647, %v351
    %v359 = vand.u32 %v358, 8388607
    %v360 = vor.u32 %v359, 8388608
    %v361 = vsub.s32 0, %v360
    %v362 = vadd.s32 %v357, 1
    %vm363 = vcmp.gt.s32.totalorder %v362, 0
    %v364 = vsel %vm363, %v362, 0
    %v365 = vshrl.u32 %v364, 5
    %v366 = vand.u32 %v364, 31
    %v367 = vsub.s32 32, %v366
    %v368 = vshrl.u32 683565275, %v367
    %v369 = vshll.u32 683565275, %v366
    %v370 = vshrl.u32 2475754826, %v367
    %v371 = vor.u32 %v369, %v370
    %v372 = vshll.u32 2475754826, %v366
    %v373 = vshrl.u32 2131351028, %v367
    %v374 = vor.u32 %v372, %v373
    %v375 = vshll.u32 2131351028, %v366
    %v376 = vshrl.u32 2102212464, %v367
    %v377 = vor.u32 %v375, %v376
    %v378 = vshll.u32 2102212464, %v366
    %v379 = vshrl.u32 920167782, %v367
    %v380 = vor.u32 %v378, %v379
    %v381 = vshll.u32 920167782, %v366
    %v382 = vshrl.u32 1326507024, %v367
    %v383 = vor.u32 %v381, %v382
    %vm384 = vcmp.lt.s32.totalorder %v365, 1
    %vm385 = vcmp.lt.s32.totalorder %v365, 2
    %vm386 = vcmp.lt.s32.totalorder %v365, 3
    %vm387 = vcmp.lt.s32.totalorder %v365, 4
    %v388 = vsel %vm384, %v368, %v371
    %v389 = vsel %vm387, %v377, 2102212464
    %v390 = vsel %vm386, %v374, %v389
    %v391 = vsel %vm385, %v388, %v390
    %v392 = vsel %vm384, %v371, %v374
    %v393 = vsel %vm387, %v380, 920167782
    %v394 = vsel %vm386, %v377, %v393
    %v395 = vsel %vm385, %v392, %v394
    %v396 = vsel %vm384, %v374, %v377
    %v397 = vsel %vm387, %v383, 1326507024
    %v398 = vsel %vm386, %v380, %v397
    %v399 = vsel %vm385, %v396, %v398
    %v400 = vshll.u32 %v360, 8
    %v401 = vand.u32 %v400, 65535
    %v402 = vshrl.u32 %v400, 16
    %v403 = vand.u32 %v399, 65535
    %v404 = vshrl.u32 %v399, 16
    %v405 = vmul.u32 %v401, %v403
    %v406 = vmul.u32 %v401, %v404
    %v407 = vmul.u32 %v402, %v403
    %v408 = vmul.u32 %v402, %v404
    %v409 = vshll.u32 %v406, 16
    %v410 = vshrl.u32 %v406, 16
    %v411 = vshll.u32 %v407, 16
    %v412 = vshrl.u32 %v407, 16
    %vm413 = vc.u32 %v405, %v409
    %v414 = vsel %vm413, 1, 0
    %v415 = vadd.s32 %v405, %v409
    %v416 = vadd.s32 %v408, %v414
    %vm417 = vc.u32 %v415, %v411
    %v418 = vsel %vm417, 1, 0
    %v419 = vadd.s32 %v415, %v411
    %v420 = vadd.s32 %v416, %v418
    %v421 = vadd.s32 %v420, %v410
    %v422 = vadd.s32 %v421, %v412
    %v423 = vand.u32 %v400, 65535
    %v424 = vshrl.u32 %v400, 16
    %v425 = vand.u32 %v395, 65535
    %v426 = vshrl.u32 %v395, 16
    %v427 = vmul.u32 %v423, %v425
    %v428 = vmul.u32 %v423, %v426
    %v429 = vmul.u32 %v424, %v425
    %v430 = vmul.u32 %v424, %v426
    %v431 = vshll.u32 %v428, 16
    %v432 = vshrl.u32 %v428, 16
    %v433 = vshll.u32 %v429, 16
    %v434 = vshrl.u32 %v429, 16
    %vm435 = vc.u32 %v427, %v431
    %v436 = vsel %vm435, 1, 0
    %v437 = vadd.s32 %v427, %v431
    %v438 = vadd.s32 %v430, %v436
    %vm439 = vc.u32 %v437, %v433
    %v440 = vsel %vm439, 1, 0
    %v441 = vadd.s32 %v437, %v433
    %v442 = vadd.s32 %v438, %v440
    %v443 = vadd.s32 %v442, %v432
    %v444 = vadd.s32 %v443, %v434
    %v445 = vmul.u32 %v400, %v391
    %v446 = vadd.s32 %v422, %v441
    %vm447 = vc.u32 %v422, %v441
    %v448 = vadd.s32 %v444, 1
    %v449 = vsel %vm447, %v448, %v444
    %v450 = vadd.s32 %v445, %v449
    %v451 = vadd.s32 %v450, 536870912
    %v452 = vshrl.u32 %v451, 30
    %v453 = vshll.u32 %v452, 30
    %v454 = vsub.s32 %v450, %v453
    %vm455 = vcmp.lt.s32.totalorder %v454, 0
    %v456 = vsub.s32 0, %v454
    %v457 = vsel %vm455, %v456, %v454
    %v458 = vclz %v457
    %v459 = vsub.s32 %v458, 2
    %vm460 = vcmp.gt.s32.totalorder 0, %v459
    %v461 = vsel %vm460, 0, %v459
    %v462 = vsub.s32 32, %v461
    %v463 = vshll.u32 %v454, %v461
    %v464 = vshrl.u32 %v446, %v462
    %v465 = vor.u32 %v463, %v464
    %v466 = vsub.s32 4294967266, %v461
    %v467 = vadd.s32 %v466, 127
    %v468 = vshll.u32 %v467, 23
    %v469 = vor.u32 4788187, %v468
    %v470 = vand.u32 2147483647, %v469
    %v472 = vcvt.s32.f32 %v465
    %v473 = vmul.f32 %v472, %v470
    %v474 = vxor.u32 %v473, 2147483648
    %v475 = vsel %vm354, %v474, %v473
    %v476 = vsub.s32 4, %v452
    %v477 = vsel %vm354, %v476, %v452
    %v478 = vsel %vm353, %v351, %v475
    %v479 = vsel %vm353, 0, %v477
    %v480 = vmul.f32 %v478, %v478
    %v481 = vmul.f32 %v480, -0.001358992
    %v482 = vadd.f32 %v481, 0.041655596
    %v483 = vmul.f32 %v480, %v482
    %v484 = vadd.f32 %v483, -0.4999988
    %v485 = vmul.f32 %v480, %v484
    %v486 = vadd.f32 1.0, %v485
    %v487 = vmul.f32 %v478, %v478
    %v488 = vmul.f32 %v487, -0.00019511016
    %v489 = vadd.f32 %v488, 0.008332121
    %v490 = vmul.f32 %v487, %v489
    %v491 = vadd.f32 %v490, -0.16666654
    %v492 = vmul.f32 %v487, %v491
    %v493 = vadd.f32 %v492, 1.0
    %v494 = vmul.f32 %v493, %v478
    %vm495 = vweird.f32 %v351
    %v496 = vadd.s32 %v479, 3
    %v497 = vand.u32 %v496, 3
    %vm498 = vcmp.lt.s32.totalorder %v497, 2
    %vm499 = vcmp.eq.s32.totalorder %v497, 0
    %v500 = vxor.u32 %v494, 2147483648
    %v501 = vsel %vm499, %v486, %v500
    %vm502 = vcmp.eq.s32.totalorder %v497, 2
    %v503 = vxor.u32 %v486, 2147483648
    %v504 = vsel %vm502, %v503, %v494
    %v505 = vsel %vm498, %v501, %v504
    %v506 = vsel %vm495, nan, %v505
    %v507 = vadd.f32 %v70, %v506
    %v508 = vadd.f32 %v507, %v71
    %510 = vset.pattern.permute.xlu0 0
    %511 = vperm.xlu0 %510, %v507
    %v512 = vpop.permute.xlu0 %511
    %v514 = vadd.f32 %v327, %v512
    %v515 = vadd.f32 %v347, %v512
    %v516 = vtanh.pop %v514
    %v517 = vtanh.pop %v515
    %519 = vset.pattern.permute.xlu0 0
    %520 = vperm.xlu0 %519, %v508
    %v521 = vpop.permute.xlu0 %520
    %v523 = vadd.f32 %v327, %v521
    %v524 = vadd.f32 %v347, %v521
    %v525 = vtanh.pop %v523
    %v526 = vtanh.pop %v524
    %s527 = sld [smem:[#allocation2 + $0x1]]
    %v528 = vsub.f32 %v525, %v516
    %v529 = vsub.f32 %v526, %v517
    %v530 = vstv %s527
    %v531 = vmul.f32 %v530, %v528
    %v532 = vmul.f32 %v530, %v529
    %v533 = vadd.f32 %v516, %v531
    %v534 = vadd.f32 %v517, %v532
    %s535 = scalar_lea.vmem [#allocation9], 16
    %536 = vst [vmem:[%s535] sm:$0xff] %v533
    %537 = vst [vmem:[%s535 + $0x8] sm:$0xff] %v534
    // Predicated region
    $region42: #{tpu_custom_call.1} parent=1 // pred_check
      _
    $region43: #{tpu_custom_call.1} parent=1 // pred_check_branch
      %539 = sbr.rel (0) target = $region45
    $region44: #{tpu_custom_call.1} parent=1 // pred_region
      %541 = vsyncadd [#allocation4], 0
      %s542 = sshll.u32 [#allocation9], 4
      %s543 = int_to_ptr.vmem [resolvable:$true] %s542
      %s544 = sshll.u32 %s7, 4
      %s545 = int_to_ptr.hbm [resolvable:$true] %s544
      %550 = dma.vmem_to_hbm [thread:$0]  %s543, 512, %s545, [#allocation4], 256, 256, 16
    $region45: #{tpu_custom_call.1} parent=1 // pred_fallthru
      _
    // Predicated region
    $region46: #{tpu_custom_call.1} parent=1 // pred_check
      _
    $region47: #{tpu_custom_call.1} parent=1 // pred_check_branch
      %552 = sbr.rel (0) target = $region49
    $region48: #{tpu_custom_call.1} parent=1 // pred_region
      %554 = dma.done [#allocation4], 512
    $region49: #{tpu_custom_call.1} parent=1 // pred_fallthru
      _
    %555 = vsyncpa [#allocation3], 1
    %556 = vsyncpa [#allocation4], 1
    %557 = vsyncpa [#allocation5], 1
    %558 = vsyncpa [#allocation7], 1

</llo_original>
